<compile_context>
chip_gen: v6e
topology: v6e:2x2x1
jax: 0.10.0
libtpu: 0.0.40
codegen_flags: <defaults>
</compile_context>

<pallas_src>
import math
from functools import partial

import jax
import jax.numpy as jnp
from jax.experimental import pallas as pl
from jax.experimental.pallas import tpu as pltpu

_LANES = 128
_TILE_G_TARGET = 8192              # folded rows per grid step (4 MiB f32 output block)
_VMEM_LIMIT = 32 * 1024 * 1024     # 2x(4 MiB out + 4 MiB lane-padded in) + headroom


def _ceil_to(x, mult):
    return -(-x // mult) * mult


def _rbf_kernel(d_ref, sel_ref, means_ref, neg_betas_ref, out_ref, *, cutoff_upper):
    # d_ref:         (TILE_G, FOLD)  compact distances
    # sel_ref:       (FOLD, 128)     0/1 fold-broadcast selector
    # means_ref:     (1, 128)        means tiled along lanes
    # neg_betas_ref: (1, 128)        -betas tiled along lanes
    # out_ref:       (TILE_G, 128)   lane-dense folded output
    d = d_ref[...]

    # Single exact broadcast of each distance across its R-lane group via a
    # 0/1 selector matmul on the (otherwise idle) MXU.  HIGHEST precision keeps
    # the selected f32 values exact -- do NOT downgrade it.
    # TODO(synk): prototype an MXU-free XLU lane-replicate (broadcast+reshape /
    # pltpu.roll) and verify its Mosaic lowering (per-vreg shuffles, not
    # per-element selects) before switching.
    d_b = jnp.dot(d, sel_ref[...], preferred_element_type=jnp.float32,
                  precision=jax.lax.Precision.HIGHEST)            # (TILE_G, 128)

    # Soft cosine cutoff and gaussian RBF, all on the lane-dense tile.
    soft = 0.5 * (jnp.cos(d_b * (math.pi / cutoff_upper)) + 1.0)
    soft = jnp.where(d_b < cutoff_upper, soft, 0.0)

    diff = jnp.exp(-d_b) - means_ref[...]
    out_ref[...] = soft * jnp.exp(neg_betas_ref[...] * (diff * diff))


def rbf_emb_params(num_rbf, soft_cutoff_upper):
    """Deterministic parameter init, mirrors rbf_emb._initial_params()."""
    start_value = math.exp(-soft_cutoff_upper)
    end_value = math.exp(-0.0)
    means = jnp.linspace(start_value, end_value, num_rbf, dtype=jnp.float32)
    beta_val = (2.0 / num_rbf * (end_value - start_value)) ** (-2)
    betas = jnp.full((num_rbf,), beta_val, dtype=jnp.float32)
    return means, betas


@partial(jax.jit, static_argnames=("soft_cutoff_upper",))
def rbf_emb_forward(dist, means, betas, soft_cutoff_upper):
    """Computes rbf_emb.forward(dist) -> shape dist.shape + (num_rbf,)."""
    dist = dist.astype(jnp.float32)
    orig_shape = dist.shape
    num_rbf = means.shape[0]

    # TODO(synk): add an unfolded fallback path for num_rbf that doesn't divide 128.
    assert _LANES % num_rbf == 0, "kernel assumes num_rbf divides 128"
    fold = _LANES // num_rbf                     # distances packed per 128-lane row

    m = int(dist.size)
    g = max(1, -(-m // fold))                    # folded rows needed
    g8 = _ceil_to(g, 8)
    # Balanced tiling: never pad g up to a full _TILE_G_TARGET tile; split the
    # (8-aligned) row count evenly across blocks instead.
    num_blocks = -(-g8 // _TILE_G_TARGET)
    tile_g = _ceil_to(-(-g8 // num_blocks), 8)
    g_pad = tile_g * num_blocks
    m_pad = g_pad * fold

    flat = dist.reshape(-1)
    if m_pad != m:
        flat = jnp.pad(flat, (0, m_pad - m))
    dist_folded = flat.reshape(g_pad, fold)

    # Tiny resident constants: lane-tiled params + fold-broadcast selector.
    means_tiled = jnp.tile(means, fold).reshape(1, _LANES)
    neg_betas_tiled = (-jnp.tile(betas, fold)).reshape(1, _LANES)
    sel = (jnp.arange(_LANES)[None, :] // num_rbf
           == jnp.arange(fold)[:, None]).astype(jnp.float32)       # (fold, 128)

    kernel = pl.pallas_call(
        partial(_rbf_kernel, cutoff_upper=float(soft_cutoff_upper)),
        out_shape=jax.ShapeDtypeStruct((g_pad, _LANES), jnp.float32),
        grid=(num_blocks,),
        in_specs=[
            pl.BlockSpec((tile_g, fold), lambda i: (i, 0)),
            pl.BlockSpec((fold, _LANES), lambda i: (0, 0)),
            pl.BlockSpec((1, _LANES), lambda i: (0, 0)),
            pl.BlockSpec((1, _LANES), lambda i: (0, 0)),
        ],
        out_specs=pl.BlockSpec((tile_g, _LANES), lambda i: (i, 0)),
        compiler_params=pltpu.CompilerParams(
            dimension_semantics=("parallel",),   # megacore / dual-TC sharding on v7x
            vmem_limit_bytes=_VMEM_LIMIT,        # v5e default scoped limit is only 16 MiB
        ),
        cost_estimate=pl.CostEstimate(
            flops=int((2 * fold + 8) * g_pad * _LANES),
            transcendentals=int(3 * g_pad * _LANES),
            bytes_accessed=int(4 * (m_pad + g_pad * _LANES)),
        ),
    )
    out_folded = kernel(dist_folded, sel, means_tiled, neg_betas_tiled)

    # (g_pad, 128) is the same contiguous memory as (m_pad, num_rbf); only take
    # the slice (which XLA materializes as an extra HBM copy) if padding was
    # actually added.
    out = out_folded.reshape(m_pad, num_rbf)
    if m_pad != m:
        out = out[:m]
    return out.reshape(*orig_shape, num_rbf)


def rbf_emb_reference(dist, means, betas, soft_cutoff_upper):
    """Pure-JAX reference matching the PyTorch forward exactly."""
    d = dist.astype(jnp.float32)[..., None]
    soft = 0.5 * (jnp.cos(d * math.pi / soft_cutoff_upper) + 1.0)
    soft = soft * (d < soft_cutoff_upper).astype(jnp.float32)
    return soft * jnp.exp(-betas * jnp.square(jnp.exp(-d) - means))


if __name__ == "__main__":
    num_rbf = 16
    soft_cutoff_upper = 5.0

    means, betas = rbf_emb_params(num_rbf, soft_cutoff_upper)

    # dist: pairwise-distance-like input, shape (batch=2, num_edges=8)
    key = jax.random.PRNGKey(0)
    dist = jax.random.uniform(
        key, (2, 8), dtype=jnp.float32, minval=0.0, maxval=6.0
    )

    out = rbf_emb_forward(dist, means, betas, soft_cutoff_upper)
    out = jax.block_until_ready(out)

    ref = rbf_emb_reference(dist, means, betas, soft_cutoff_upper)
    assert out.shape == (2, 8, num_rbf), out.shape
    assert jnp.allclose(out, ref, atol=1e-5, rtol=1e-5), "mismatch vs reference"

    print("KERNEL_OK")
</pallas_src>

<mosaic_0001>
module attributes {stable_mosaic.version = 11 : i64} {
  func.func @_rbf_kernel(%arg0: i32, %arg1: memref<8x8xf32, #tpu.memory_space<vmem>>, %arg2: memref<8x128xf32, #tpu.memory_space<vmem>>, %arg3: memref<1x128xf32, #tpu.memory_space<vmem>>, %arg4: memref<1x128xf32, #tpu.memory_space<vmem>>, %arg5: memref<8x128xf32, #tpu.memory_space<vmem>>) attributes {dimension_semantics = [#tpu.dimension_semantics<parallel>], iteration_bounds = array<i64: 1>, scalar_prefetch = 0 : i64, scratch_operands = 0 : i64, tpu.core_type = #tpu.core_type<tc>, window_params = [{transform_indices = @transform_0, window_bounds = array<i64: 8, 8>}, {pipeline_mode = #tpu.pipeline_mode<synchronous>, transform_indices = @transform_1, window_bounds = array<i64: 8, 128>}, {pipeline_mode = #tpu.pipeline_mode<synchronous>, transform_indices = @transform_2, window_bounds = array<i64: 1, 128>}, {pipeline_mode = #tpu.pipeline_mode<synchronous>, transform_indices = @transform_3, window_bounds = array<i64: 1, 128>}, {transform_indices = @transform_4, window_bounds = array<i64: 8, 128>}]} {
    %c0 = arith.constant 0 : index
    %c0_0 = arith.constant 0 : index
    %0 = vector.load %arg1[%c0, %c0_0] : memref<8x8xf32, #tpu.memory_space<vmem>>, vector<8x8xf32>
    %c0_1 = arith.constant 0 : index
    %c0_2 = arith.constant 0 : index
    %1 = vector.load %arg2[%c0_1, %c0_2] : memref<8x128xf32, #tpu.memory_space<vmem>>, vector<8x128xf32>
    %cst = arith.constant dense<0.000000e+00> : vector<8x128xf32>
    %2 = tpu.matmul %0, %1, %cst {dimension_numbers = #tpu.dot_dimension_numbers<[1], [0], [0], [1], [0, 0, 1, 1], [], []>, precision = #tpu.contract_precision<fp32>} : vector<8x8xf32>, vector<8x128xf32>, vector<8x128xf32> -> vector<8x128xf32>
    %cst_3 = arith.constant 0.628318548 : f32
    %3 = vector.broadcast %cst_3 : f32 to vector<8x128xf32>
    %4 = arith.mulf %2, %3 : vector<8x128xf32>
    %5 = math.cos %4 : vector<8x128xf32>
    %cst_4 = arith.constant 1.000000e+00 : f32
    %6 = vector.broadcast %cst_4 : f32 to vector<8x128xf32>
    %7 = arith.addf %5, %6 : vector<8x128xf32>
    %cst_5 = arith.constant 5.000000e-01 : f32
    %8 = vector.broadcast %cst_5 : f32 to vector<8x128xf32>
    %9 = arith.mulf %8, %7 : vector<8x128xf32>
    %cst_6 = arith.constant 5.000000e+00 : f32
    %10 = vector.broadcast %cst_6 : f32 to vector<8x128xf32>
    %11 = arith.cmpf olt, %2, %10 : vector<8x128xf32>
    %cst_7 = arith.constant 0.000000e+00 : f32
    %12 = vector.broadcast %cst_7 : f32 to vector<8x128xf32>
    %13 = arith.select %11, %9, %12 : vector<8x128xi1>, vector<8x128xf32>
    %cst_8 = arith.constant 0.000000e+00 : f32
    %14 = vector.broadcast %cst_8 : f32 to vector<8x128xf32>
    %15 = arith.subf %14, %2 : vector<8x128xf32>
    %16 = math.exp %15 : vector<8x128xf32>
    %c0_9 = arith.constant 0 : index
    %c0_10 = arith.constant 0 : index
    %17 = vector.load %arg3[%c0_9, %c0_10] : memref<1x128xf32, #tpu.memory_space<vmem>>, vector<1x128xf32>
    %18 = vector.broadcast %17 : vector<1x128xf32> to vector<8x128xf32>
    %19 = arith.subf %16, %18 : vector<8x128xf32>
    %c0_11 = arith.constant 0 : index
    %c0_12 = arith.constant 0 : index
    %20 = vector.load %arg4[%c0_11, %c0_12] : memref<1x128xf32, #tpu.memory_space<vmem>>, vector<1x128xf32>
    %21 = arith.mulf %19, %19 : vector<8x128xf32>
    %22 = vector.broadcast %20 : vector<1x128xf32> to vector<8x128xf32>
    %23 = arith.mulf %22, %21 : vector<8x128xf32>
    %24 = math.exp %23 : vector<8x128xf32>
    %25 = arith.mulf %13, %24 : vector<8x128xf32>
    %c0_13 = arith.constant 0 : index
    %c0_14 = arith.constant 0 : index
    %26 = vector.load %arg5[%c0_13, %c0_14] : memref<8x128xf32, #tpu.memory_space<vmem>>, vector<8x128xf32>
    tpu.vector_store %arg5[%c0_13, %c0_14], %25 {strides = array<i32>} : memref<8x128xf32, #tpu.memory_space<vmem>>, vector<8x128xf32>,
    return
  }
  func.func @transform_0(%arg0: i32) -> (i32, i32) {
    %c0_i32 = arith.constant 0 : i32
    %c0_i32_0 = arith.constant 0 : i32
    return %arg0, %c0_i32 : i32, i32
  }
  func.func @transform_1(%arg0: i32) -> (i32, i32) {
    %c0_i32 = arith.constant 0 : i32
    %c0_i32_0 = arith.constant 0 : i32
    %c0_i32_1 = arith.constant 0 : i32
    return %c0_i32, %c0_i32_0 : i32, i32
  }
  func.func @transform_2(%arg0: i32) -> (i32, i32) {
    %c0_i32 = arith.constant 0 : i32
    %c0_i32_0 = arith.constant 0 : i32
    %c0_i32_1 = arith.constant 0 : i32
    return %c0_i32, %c0_i32_0 : i32, i32
  }
  func.func @transform_3(%arg0: i32) -> (i32, i32) {
    %c0_i32 = arith.constant 0 : i32
    %c0_i32_0 = arith.constant 0 : i32
    %c0_i32_1 = arith.constant 0 : i32
    return %c0_i32, %c0_i32_0 : i32, i32
  }
  func.func @transform_4(%arg0: i32) -> (i32, i32) {
    %c0_i32 = arith.constant 0 : i32
    %c0_i32_0 = arith.constant 0 : i32
    return %arg0, %c0_i32 : i32, i32
  }
}

</mosaic_0001>

<llo_original>
// kernel: neg.9
$region0: #{neg.9}
  #allocation0 [shape = 's32[1]{0}', space=sflag, size = 0x4, scoped, tag = 'scoped memory for neg.9']
  %s0 = inlined_call_operand.vmem [shape: f32[16], index: 0, kind: input, shape index: {}]
  %s1 = inlined_call_operand.vmem [shape: f32[16], index: 1, kind: output, shape index: {}]
  %v2 = vld [vmem:[%s0] sm:$0x1]
  %3 = xla_tuple %v2
  %4 = xla_tuple %3
  %v5 = vxor.u32 %v2, 2147483648
  %6 = xla_tuple %v5
  %7 = vst [vmem:[%s1] sm:$0x1] %v5

// kernel: rbf_emb_forward.1
$region0: #{rbf_emb_forward.1}
  #allocation0 [shape = 'u32[]', space=smem, size = 0x4, offset = 0x4, fixed_abs, tag = 'smem constant byte address 0x4 - core index']
  #allocation1 [shape = 'u32[144,128]{1,0:T(1,128)}', space=vmem, size = 0x12000, scoped, tag = 'internal scratch']
  %s0 = inlined_call_operand.vmem [shape: f32[8,8], index: 0, kind: input, shape index: {}]
  %s1 = inlined_call_operand.vmem [shape: f32[8,128], index: 1, kind: input, shape index: {}]
  %s2 = inlined_call_operand.vmem [shape: f32[1,128], index: 2, kind: input, shape index: {}]
  %s3 = inlined_call_operand.vmem [shape: f32[1,128], index: 3, kind: input, shape index: {}]
  %s4 = inlined_call_operand.vmem [shape: f32[8,128], index: 4, kind: output, shape index: {}]
  %s5 = sld [smem:[#allocation0]]
  $region26: #{rbf_emb_forward.1} parent=0
    _
  %s7 = ssub.s32 1, %s5
  %s8 = scalar_select 0, %s7, %s5
  // Predicated region
  $region2: #{rbf_emb_forward.1} parent=0 // pred_check
    _
  $region3: #{rbf_emb_forward.1} parent=0 // pred_check_branch
    %10 = sbr.rel (0) target = $region5
  $region4: #{rbf_emb_forward.1} parent=0 // pred_region
    _
  $region5: #{rbf_emb_forward.1} parent=0 // pred_fallthru
    _
  // Predicated region
  $region6: #{rbf_emb_forward.1} parent=0 // pred_check
    _
  $region7: #{rbf_emb_forward.1} parent=0 // pred_check_branch
    %12 = sbr.rel (0) target = $region9
  $region8: #{rbf_emb_forward.1} parent=0 // pred_region
    _
  $region9: #{rbf_emb_forward.1} parent=0 // pred_fallthru
    _
  // Predicated region
  $region10: #{rbf_emb_forward.1} parent=0 // pred_check
    _
  $region11: #{rbf_emb_forward.1} parent=0 // pred_check_branch
    %14 = sbr.rel (0) target = $region13
  $region12: #{rbf_emb_forward.1} parent=0 // pred_region
    _
  $region13: #{rbf_emb_forward.1} parent=0 // pred_fallthru
    _
  // Predicated region
  $region14: #{rbf_emb_forward.1} parent=0 // pred_check
    _
  $region15: #{rbf_emb_forward.1} parent=0 // pred_check_branch
    %16 = sbr.rel (0) target = $region17
  $region16: #{rbf_emb_forward.1} parent=0 // pred_region
    _
  $region17: #{rbf_emb_forward.1} parent=0 // pred_fallthru
    _
  %v17 = vld [vmem:[%s0] sm:$0xff]
  %v18 = vld [vmem:[%s1] sm:$0xff]
  %vm19 = vcmask 64512
  %v21 = vsel %vm19, %v17, 0
  %23 = vmatprep.subr.mxu0 0.0
  %24 = vmatpush1.msra.mxu0 0.0
  %25 = vmatprep.subr.mxu0 0.0
  %26 = vmatpush1.msra.mxu0 0.0
  %27 = vmatprep.subr.mxu0 0.0
  %28 = vmatpush1.msra.mxu0 0.0
  %29 = vmatprep.subr.mxu0 0.0
  %30 = vmatpush1.msra.mxu0 0.0
  %31 = vmatprep.subr.mxu0 0.0
  %32 = vmatpush1.msra.mxu0 0.0
  %33 = vmatprep.subr.mxu0 0.0
  %34 = vmatpush1.msra.mxu0 0.0
  %35 = vmatprep.subr.mxu0 0.0
  %36 = vmatpush1.msra.mxu0 0.0
  %37 = vmatprep.subr.mxu0 0.0
  %38 = vmatpush1.msra.mxu0 0.0
  %39 = vmatprep.subr.mxu0 0.0
  %40 = vmatpush1.msra.mxu0 0.0
  %41 = vmatprep.subr.mxu0 0.0
  %42 = vmatpush1.msra.mxu0 0.0
  %43 = vmatprep.subr.mxu0 0.0
  %44 = vmatpush1.msra.mxu0 0.0
  %45 = vmatprep.subr.mxu0 0.0
  %46 = vmatpush1.msra.mxu0 0.0
  %47 = vmatprep.subr.mxu0 0.0
  %48 = vmatpush1.msra.mxu0 0.0
  %49 = vmatprep.subr.mxu0 0.0
  %50 = vmatpush1.msra.mxu0 0.0
  %51 = vmatprep.subr.mxu0 0.0
  %52 = vmatpush1.msra.mxu0 0.0
  %53 = vmatprep.subr.mxu0 0.0
  %v54 = vand.u32 %v18, 4294901760
  %55 = vmatpush1.msra.mxu0 %v54
  %56 = vmatprep.subr.mxu0 0.0
  %57 = vmatpush2.msra.mxu0 0.0
  %58 = vmatprep.subr.mxu0 0.0
  %59 = vmatpush2.msra.mxu0 0.0
  %60 = vmatprep.subr.mxu0 0.0
  %61 = vmatpush2.msra.mxu0 0.0
  %62 = vmatprep.subr.mxu0 0.0
  %63 = vmatpush2.msra.mxu0 0.0
  %64 = vmatprep.subr.mxu0 0.0
  %65 = vmatpush2.msra.mxu0 0.0
  %66 = vmatprep.subr.mxu0 0.0
  %67 = vmatpush2.msra.mxu0 0.0
  %68 = vmatprep.subr.mxu0 0.0
  %69 = vmatpush2.msra.mxu0 0.0
  %70 = vmatprep.subr.mxu0 0.0
  %71 = vmatpush2.msra.mxu0 0.0
  %72 = vmatprep.subr.mxu0 0.0
  %73 = vmatpush2.msra.mxu0 0.0
  %74 = vmatprep.subr.mxu0 0.0
  %75 = vmatpush2.msra.mxu0 0.0
  %76 = vmatprep.subr.mxu0 0.0
  %77 = vmatpush2.msra.mxu0 0.0
  %78 = vmatprep.subr.mxu0 0.0
  %79 = vmatpush2.msra.mxu0 0.0
  %80 = vmatprep.subr.mxu0 0.0
  %81 = vmatpush2.msra.mxu0 0.0
  %82 = vmatprep.subr.mxu0 0.0
  %83 = vmatpush2.msra.mxu0 0.0
  %84 = vmatprep.subr.mxu0 0.0
  %85 = vmatpush2.msra.mxu0 0.0
  %86 = vmatprep.subr.mxu0 0.0
  %87 = vmatpush2.msra.mxu0 0.0
  %88 = vmatprep.mubr.f32.mxu0 0.0
  %v89 = vand.u32 %v21, 4294901760
  %v90 = vsub.f32 %v21, %v89
  %v91 = vand.u32 %v90, 4294901760
  %v92 = vsub.f32 %v90, %v91
  %v93 = vand.u32 %v92, 4294901760
  %94 = vmatmul.mubr.f32.gmra.mxu0 %v93
  %v95 = vpop.f32.mrf.mxu0
  %v96 = vadd.f32 0.0, %v95
  %v97 = vpop.f32.mrf.mxu0
  %98 = vdwg.mxu0
  %99 = vmatprep.subr.mxu0 0.0
  %100 = vmatpush1.msra.mxu0 0.0
  %101 = vmatprep.subr.mxu0 0.0
  %102 = vmatpush1.msra.mxu0 0.0
  %103 = vmatprep.subr.mxu0 0.0
  %104 = vmatpush1.msra.mxu0 0.0
  %105 = vmatprep.subr.mxu0 0.0
  %106 = vmatpush1.msra.mxu0 0.0
  %107 = vmatprep.subr.mxu0 0.0
  %108 = vmatpush1.msra.mxu0 0.0
  %109 = vmatprep.subr.mxu0 0.0
  %110 = vmatpush1.msra.mxu0 0.0
  %111 = vmatprep.subr.mxu0 0.0
  %112 = vmatpush1.msra.mxu0 0.0
  %113 = vmatprep.subr.mxu0 0.0
  %114 = vmatpush1.msra.mxu0 0.0
  %115 = vmatprep.subr.mxu0 0.0
  %116 = vmatpush1.msra.mxu0 0.0
  %117 = vmatprep.subr.mxu0 0.0
  %118 = vmatpush1.msra.mxu0 0.0
  %119 = vmatprep.subr.mxu0 0.0
  %120 = vmatpush1.msra.mxu0 0.0
  %121 = vmatprep.subr.mxu0 0.0
  %122 = vmatpush1.msra.mxu0 0.0
  %123 = vmatprep.subr.mxu0 0.0
  %124 = vmatpush1.msra.mxu0 0.0
  %125 = vmatprep.subr.mxu0 0.0
  %126 = vmatpush1.msra.mxu0 0.0
  %127 = vmatprep.subr.mxu0 0.0
  %128 = vmatpush1.msra.mxu0 0.0
  %129 = vmatprep.subr.mxu0 0.0
  %v130 = vand.u32 %v18, 4294901760
  %v131 = vsub.f32 %v18, %v130
  %v132 = vand.u32 %v131, 4294901760
  %v133 = vsub.f32 %v131, %v132
  %v134 = vand.u32 %v133, 4294901760
  %135 = vmatpush1.msra.mxu0 %v134
  %136 = vmatprep.subr.mxu0 0.0
  %137 = vmatpush2.msra.mxu0 0.0
  %138 = vmatprep.subr.mxu0 0.0
  %139 = vmatpush2.msra.mxu0 0.0
  %140 = vmatprep.subr.mxu0 0.0
  %141 = vmatpush2.msra.mxu0 0.0
  %142 = vmatprep.subr.mxu0 0.0
  %143 = vmatpush2.msra.mxu0 0.0
  %144 = vmatprep.subr.mxu0 0.0
  %145 = vmatpush2.msra.mxu0 0.0
  %146 = vmatprep.subr.mxu0 0.0
  %147 = vmatpush2.msra.mxu0 0.0
  %148 = vmatprep.subr.mxu0 0.0
  %149 = vmatpush2.msra.mxu0 0.0
  %150 = vmatprep.subr.mxu0 0.0
  %151 = vmatpush2.msra.mxu0 0.0
  %152 = vmatprep.subr.mxu0 0.0
  %153 = vmatpush2.msra.mxu0 0.0
  %154 = vmatprep.subr.mxu0 0.0
  %155 = vmatpush2.msra.mxu0 0.0
  %156 = vmatprep.subr.mxu0 0.0
  %157 = vmatpush2.msra.mxu0 0.0
  %158 = vmatprep.subr.mxu0 0.0
  %159 = vmatpush2.msra.mxu0 0.0
  %160 = vmatprep.subr.mxu0 0.0
  %161 = vmatpush2.msra.mxu0 0.0
  %162 = vmatprep.subr.mxu0 0.0
  %163 = vmatpush2.msra.mxu0 0.0
  %164 = vmatprep.subr.mxu0 0.0
  %165 = vmatpush2.msra.mxu0 0.0
  %166 = vmatprep.subr.mxu0 0.0
  %167 = vmatpush2.msra.mxu0 0.0
  %168 = vmatprep.mubr.f32.mxu0 0.0
  %v169 = vand.u32 %v21, 4294901760
  %170 = vmatmul.mubr.f32.gmra.mxu0 %v169
  %v171 = vpop.f32.mrf.mxu0
  %v172 = vadd.f32 %v96, %v171
  %v173 = vpop.f32.mrf.mxu0
  %174 = vdwg.mxu0
  %175 = vmatprep.subr.mxu0 0.0
  %176 = vmatpush1.msra.mxu0 0.0
  %177 = vmatprep.subr.mxu0 0.0
  %178 = vmatpush1.msra.mxu0 0.0
  %179 = vmatprep.subr.mxu0 0.0
  %180 = vmatpush1.msra.mxu0 0.0
  %181 = vmatprep.subr.mxu0 0.0
  %182 = vmatpush1.msra.mxu0 0.0
  %183 = vmatprep.subr.mxu0 0.0
  %184 = vmatpush1.msra.mxu0 0.0
  %185 = vmatprep.subr.mxu0 0.0
  %186 = vmatpush1.msra.mxu0 0.0
  %187 = vmatprep.subr.mxu0 0.0
  %188 = vmatpush1.msra.mxu0 0.0
  %189 = vmatprep.subr.mxu0 0.0
  %190 = vmatpush1.msra.mxu0 0.0
  %191 = vmatprep.subr.mxu0 0.0
  %192 = vmatpush1.msra.mxu0 0.0
  %193 = vmatprep.subr.mxu0 0.0
  %194 = vmatpush1.msra.mxu0 0.0
  %195 = vmatprep.subr.mxu0 0.0
  %196 = vmatpush1.msra.mxu0 0.0
  %197 = vmatprep.subr.mxu0 0.0
  %198 = vmatpush1.msra.mxu0 0.0
  %199 = vmatprep.subr.mxu0 0.0
  %200 = vmatpush1.msra.mxu0 0.0
  %201 = vmatprep.subr.mxu0 0.0
  %202 = vmatpush1.msra.mxu0 0.0
  %203 = vmatprep.subr.mxu0 0.0
  %204 = vmatpush1.msra.mxu0 0.0
  %205 = vmatprep.subr.mxu0 0.0
  %v206 = vand.u32 %v18, 4294901760
  %v207 = vsub.f32 %v18, %v206
  %208 = vmatpush1.msra.mxu0 %v207
  %209 = vmatprep.subr.mxu0 0.0
  %210 = vmatpush2.msra.mxu0 0.0
  %211 = vmatprep.subr.mxu0 0.0
  %212 = vmatpush2.msra.mxu0 0.0
  %213 = vmatprep.subr.mxu0 0.0
  %214 = vmatpush2.msra.mxu0 0.0
  %215 = vmatprep.subr.mxu0 0.0
  %216 = vmatpush2.msra.mxu0 0.0
  %217 = vmatprep.subr.mxu0 0.0
  %218 = vmatpush2.msra.mxu0 0.0
  %219 = vmatprep.subr.mxu0 0.0
  %220 = vmatpush2.msra.mxu0 0.0
  %221 = vmatprep.subr.mxu0 0.0
  %222 = vmatpush2.msra.mxu0 0.0
  %223 = vmatprep.subr.mxu0 0.0
  %224 = vmatpush2.msra.mxu0 0.0
  %225 = vmatprep.subr.mxu0 0.0
  %226 = vmatpush2.msra.mxu0 0.0
  %227 = vmatprep.subr.mxu0 0.0
  %228 = vmatpush2.msra.mxu0 0.0
  %229 = vmatprep.subr.mxu0 0.0
  %230 = vmatpush2.msra.mxu0 0.0
  %231 = vmatprep.subr.mxu0 0.0
  %232 = vmatpush2.msra.mxu0 0.0
  %233 = vmatprep.subr.mxu0 0.0
  %234 = vmatpush2.msra.mxu0 0.0
  %235 = vmatprep.subr.mxu0 0.0
  %236 = vmatpush2.msra.mxu0 0.0
  %237 = vmatprep.subr.mxu0 0.0
  %238 = vmatpush2.msra.mxu0 0.0
  %239 = vmatprep.subr.mxu0 0.0
  %240 = vmatpush2.msra.mxu0 0.0
  %241 = vmatprep.mubr.f32.mxu0 0.0
  %v242 = vand.u32 %v21, 4294901760
  %v243 = vsub.f32 %v21, %v242
  %244 = vmatmul.mubr.f32.gmra.mxu0 %v243
  %v245 = vpop.f32.mrf.mxu0
  %v246 = vadd.f32 %v172, %v245
  %v247 = vpop.f32.mrf.mxu0
  %248 = vdwg.mxu0
  %249 = vmatprep.subr.mxu0 0.0
  %250 = vmatpush1.msra.mxu0 0.0
  %251 = vmatprep.subr.mxu0 0.0
  %252 = vmatpush1.msra.mxu0 0.0
  %253 = vmatprep.subr.mxu0 0.0
  %254 = vmatpush1.msra.mxu0 0.0
  %255 = vmatprep.subr.mxu0 0.0
  %256 = vmatpush1.msra.mxu0 0.0
  %257 = vmatprep.subr.mxu0 0.0
  %258 = vmatpush1.msra.mxu0 0.0
  %259 = vmatprep.subr.mxu0 0.0
  %260 = vmatpush1.msra.mxu0 0.0
  %261 = vmatprep.subr.mxu0 0.0
  %262 = vmatpush1.msra.mxu0 0.0
  %263 = vmatprep.subr.mxu0 0.0
  %264 = vmatpush1.msra.mxu0 0.0
  %265 = vmatprep.subr.mxu0 0.0
  %266 = vmatpush1.msra.mxu0 0.0
  %267 = vmatprep.subr.mxu0 0.0
  %268 = vmatpush1.msra.mxu0 0.0
  %269 = vmatprep.subr.mxu0 0.0
  %270 = vmatpush1.msra.mxu0 0.0
  %271 = vmatprep.subr.mxu0 0.0
  %272 = vmatpush1.msra.mxu0 0.0
  %273 = vmatprep.subr.mxu0 0.0
  %274 = vmatpush1.msra.mxu0 0.0
  %275 = vmatprep.subr.mxu0 0.0
  %276 = vmatpush1.msra.mxu0 0.0
  %277 = vmatprep.subr.mxu0 0.0
  %278 = vmatpush1.msra.mxu0 0.0
  %279 = vmatprep.subr.mxu0 0.0
  %v280 = vand.u32 %v18, 4294901760
  %281 = vmatpush1.msra.mxu0 %v280
  %282 = vmatprep.subr.mxu0 0.0
  %283 = vmatpush2.msra.mxu0 0.0
  %284 = vmatprep.subr.mxu0 0.0
  %285 = vmatpush2.msra.mxu0 0.0
  %286 = vmatprep.subr.mxu0 0.0
  %287 = vmatpush2.msra.mxu0 0.0
  %288 = vmatprep.subr.mxu0 0.0
  %289 = vmatpush2.msra.mxu0 0.0
  %290 = vmatprep.subr.mxu0 0.0
  %291 = vmatpush2.msra.mxu0 0.0
  %292 = vmatprep.subr.mxu0 0.0
  %293 = vmatpush2.msra.mxu0 0.0
  %294 = vmatprep.subr.mxu0 0.0
  %295 = vmatpush2.msra.mxu0 0.0
  %296 = vmatprep.subr.mxu0 0.0
  %297 = vmatpush2.msra.mxu0 0.0
  %298 = vmatprep.subr.mxu0 0.0
  %299 = vmatpush2.msra.mxu0 0.0
  %300 = vmatprep.subr.mxu0 0.0
  %301 = vmatpush2.msra.mxu0 0.0
  %302 = vmatprep.subr.mxu0 0.0
  %303 = vmatpush2.msra.mxu0 0.0
  %304 = vmatprep.subr.mxu0 0.0
  %305 = vmatpush2.msra.mxu0 0.0
  %306 = vmatprep.subr.mxu0 0.0
  %307 = vmatpush2.msra.mxu0 0.0
  %308 = vmatprep.subr.mxu0 0.0
  %309 = vmatpush2.msra.mxu0 0.0
  %310 = vmatprep.subr.mxu0 0.0
  %311 = vmatpush2.msra.mxu0 0.0
  %312 = vmatprep.subr.mxu0 0.0
  %313 = vmatpush2.msra.mxu0 0.0
  %314 = vmatprep.mubr.f32.mxu0 0.0
  %v315 = vand.u32 %v21, 4294901760
  %v316 = vsub.f32 %v21, %v315
  %v317 = vand.u32 %v316, 4294901760
  %318 = vmatmul.mubr.f32.gmra.mxu0 %v317
  %v319 = vpop.f32.mrf.mxu0
  %v320 = vadd.f32 %v246, %v319
  %v321 = vpop.f32.mrf.mxu0
  %322 = vdwg.mxu0
  %323 = vmatprep.subr.mxu0 0.0
  %324 = vmatpush1.msra.mxu0 0.0
  %325 = vmatprep.subr.mxu0 0.0
  %326 = vmatpush1.msra.mxu0 0.0
  %327 = vmatprep.subr.mxu0 0.0
  %328 = vmatpush1.msra.mxu0 0.0
  %329 = vmatprep.subr.mxu0 0.0
  %330 = vmatpush1.msra.mxu0 0.0
  %331 = vmatprep.subr.mxu0 0.0
  %332 = vmatpush1.msra.mxu0 0.0
  %333 = vmatprep.subr.mxu0 0.0
  %334 = vmatpush1.msra.mxu0 0.0
  %335 = vmatprep.subr.mxu0 0.0
  %336 = vmatpush1.msra.mxu0 0.0
  %337 = vmatprep.subr.mxu0 0.0
  %338 = vmatpush1.msra.mxu0 0.0
  %339 = vmatprep.subr.mxu0 0.0
  %340 = vmatpush1.msra.mxu0 0.0
  %341 = vmatprep.subr.mxu0 0.0
  %342 = vmatpush1.msra.mxu0 0.0
  %343 = vmatprep.subr.mxu0 0.0
  %344 = vmatpush1.msra.mxu0 0.0
  %345 = vmatprep.subr.mxu0 0.0
  %346 = vmatpush1.msra.mxu0 0.0
  %347 = vmatprep.subr.mxu0 0.0
  %348 = vmatpush1.msra.mxu0 0.0
  %349 = vmatprep.subr.mxu0 0.0
  %350 = vmatpush1.msra.mxu0 0.0
  %351 = vmatprep.subr.mxu0 0.0
  %352 = vmatpush1.msra.mxu0 0.0
  %353 = vmatprep.subr.mxu0 0.0
  %v354 = vand.u32 %v18, 4294901760
  %v355 = vsub.f32 %v18, %v354
  %v356 = vand.u32 %v355, 4294901760
  %357 = vmatpush1.msra.mxu0 %v356
  %358 = vmatprep.subr.mxu0 0.0
  %359 = vmatpush2.msra.mxu0 0.0
  %360 = vmatprep.subr.mxu0 0.0
  %361 = vmatpush2.msra.mxu0 0.0
  %362 = vmatprep.subr.mxu0 0.0
  %363 = vmatpush2.msra.mxu0 0.0
  %364 = vmatprep.subr.mxu0 0.0
  %365 = vmatpush2.msra.mxu0 0.0
  %366 = vmatprep.subr.mxu0 0.0
  %367 = vmatpush2.msra.mxu0 0.0
  %368 = vmatprep.subr.mxu0 0.0
  %369 = vmatpush2.msra.mxu0 0.0
  %370 = vmatprep.subr.mxu0 0.0
  %371 = vmatpush2.msra.mxu0 0.0
  %372 = vmatprep.subr.mxu0 0.0
  %373 = vmatpush2.msra.mxu0 0.0
  %374 = vmatprep.subr.mxu0 0.0
  %375 = vmatpush2.msra.mxu0 0.0
  %376 = vmatprep.subr.mxu0 0.0
  %377 = vmatpush2.msra.mxu0 0.0
  %378 = vmatprep.subr.mxu0 0.0
  %379 = vmatpush2.msra.mxu0 0.0
  %380 = vmatprep.subr.mxu0 0.0
  %381 = vmatpush2.msra.mxu0 0.0
  %382 = vmatprep.subr.mxu0 0.0
  %383 = vmatpush2.msra.mxu0 0.0
  %384 = vmatprep.subr.mxu0 0.0
  %385 = vmatpush2.msra.mxu0 0.0
  %386 = vmatprep.subr.mxu0 0.0
  %387 = vmatpush2.msra.mxu0 0.0
  %388 = vmatprep.subr.mxu0 0.0
  %389 = vmatpush2.msra.mxu0 0.0
  %390 = vmatprep.mubr.f32.mxu0 0.0
  %v391 = vand.u32 %v21, 4294901760
  %392 = vmatmul.mubr.f32.gmra.mxu0 %v391
  %v393 = vpop.f32.mrf.mxu0
  %v394 = vadd.f32 %v320, %v393
  %v395 = vpop.f32.mrf.mxu0
  %396 = vdwg.mxu0
  %397 = vmatprep.subr.mxu0 0.0
  %398 = vmatpush1.msra.mxu0 0.0
  %399 = vmatprep.subr.mxu0 0.0
  %400 = vmatpush1.msra.mxu0 0.0
  %401 = vmatprep.subr.mxu0 0.0
  %402 = vmatpush1.msra.mxu0 0.0
  %403 = vmatprep.subr.mxu0 0.0
  %404 = vmatpush1.msra.mxu0 0.0
  %405 = vmatprep.subr.mxu0 0.0
  %406 = vmatpush1.msra.mxu0 0.0
  %407 = vmatprep.subr.mxu0 0.0
  %408 = vmatpush1.msra.mxu0 0.0
  %409 = vmatprep.subr.mxu0 0.0
  %410 = vmatpush1.msra.mxu0 0.0
  %411 = vmatprep.subr.mxu0 0.0
  %412 = vmatpush1.msra.mxu0 0.0
  %413 = vmatprep.subr.mxu0 0.0
  %414 = vmatpush1.msra.mxu0 0.0
  %415 = vmatprep.subr.mxu0 0.0
  %416 = vmatpush1.msra.mxu0 0.0
  %417 = vmatprep.subr.mxu0 0.0
  %418 = vmatpush1.msra.mxu0 0.0
  %419 = vmatprep.subr.mxu0 0.0
  %420 = vmatpush1.msra.mxu0 0.0
  %421 = vmatprep.subr.mxu0 0.0
  %422 = vmatpush1.msra.mxu0 0.0
  %423 = vmatprep.subr.mxu0 0.0
  %424 = vmatpush1.msra.mxu0 0.0
  %425 = vmatprep.subr.mxu0 0.0
  %426 = vmatpush1.msra.mxu0 0.0
  %427 = vmatprep.subr.mxu0 0.0
  %v428 = vand.u32 %v18, 4294901760
  %429 = vmatpush1.msra.mxu0 %v428
  %430 = vmatprep.subr.mxu0 0.0
  %431 = vmatpush2.msra.mxu0 0.0
  %432 = vmatprep.subr.mxu0 0.0
  %433 = vmatpush2.msra.mxu0 0.0
  %434 = vmatprep.subr.mxu0 0.0
  %435 = vmatpush2.msra.mxu0 0.0
  %436 = vmatprep.subr.mxu0 0.0
  %437 = vmatpush2.msra.mxu0 0.0
  %438 = vmatprep.subr.mxu0 0.0
  %439 = vmatpush2.msra.mxu0 0.0
  %440 = vmatprep.subr.mxu0 0.0
  %441 = vmatpush2.msra.mxu0 0.0
  %442 = vmatprep.subr.mxu0 0.0
  %443 = vmatpush2.msra.mxu0 0.0
  %444 = vmatprep.subr.mxu0 0.0
  %445 = vmatpush2.msra.mxu0 0.0
  %446 = vmatprep.subr.mxu0 0.0
  %447 = vmatpush2.msra.mxu0 0.0
  %448 = vmatprep.subr.mxu0 0.0
  %449 = vmatpush2.msra.mxu0 0.0
  %450 = vmatprep.subr.mxu0 0.0
  %451 = vmatpush2.msra.mxu0 0.0
  %452 = vmatprep.subr.mxu0 0.0
  %453 = vmatpush2.msra.mxu0 0.0
  %454 = vmatprep.subr.mxu0 0.0
  %455 = vmatpush2.msra.mxu0 0.0
  %456 = vmatprep.subr.mxu0 0.0
  %457 = vmatpush2.msra.mxu0 0.0
  %458 = vmatprep.subr.mxu0 0.0
  %459 = vmatpush2.msra.mxu0 0.0
  %460 = vmatprep.subr.mxu0 0.0
  %461 = vmatpush2.msra.mxu0 0.0
  %462 = vmatprep.mubr.f32.mxu0 0.0
  %v463 = vand.u32 %v21, 4294901760
  %464 = vmatmul.mubr.f32.gmra.mxu0 %v463
  %v465 = vpop.f32.mrf.mxu0
  %v466 = vadd.f32 %v394, %v465
  %v467 = vpop.f32.mrf.mxu0
  %468 = vdwg.mxu0
  %v469 = vmul.f32 %v466, 0.62831855
  %v470 = vand.u32 2147483647, %v469
  %vm471 = vcmp.le.f32.partialorder %v470, 0.7853982
  %vm472 = vcmp.lt.s32.totalorder %v469, 0
  %v473 = vand.u32 %v469, 2139095040
  %v474 = vshrl.u32 %v473, 23
  %v475 = vsub.s32 %v474, 127
  %v476 = vand.u32 2147483647, %v469
  %v477 = vand.u32 %v476, 8388607
  %v478 = vor.u32 %v477, 8388608
  %v479 = vsub.s32 0, %v478
  %v480 = vadd.s32 %v475, 1
  %vm481 = vcmp.gt.s32.totalorder %v480, 0
  %v482 = vsel %vm481, %v480, 0
  %v483 = vshrl.u32 %v482, 5
  %v484 = vand.u32 %v482, 31
  %v485 = vsub.s32 32, %v484
  %v486 = vshrl.u32 683565275, %v485
  %v487 = vshll.u32 683565275, %v484
  %v488 = vshrl.u32 2475754826, %v485
  %v489 = vor.u32 %v487, %v488
  %v490 = vshll.u32 2475754826, %v484
  %v491 = vshrl.u32 2131351028, %v485
  %v492 = vor.u32 %v490, %v491
  %v493 = vshll.u32 2131351028, %v484
  %v494 = vshrl.u32 2102212464, %v485
  %v495 = vor.u32 %v493, %v494
  %v496 = vshll.u32 2102212464, %v484
  %v497 = vshrl.u32 920167782, %v485
  %v498 = vor.u32 %v496, %v497
  %v499 = vshll.u32 920167782, %v484
  %v500 = vshrl.u32 1326507024, %v485
  %v501 = vor.u32 %v499, %v500
  %vm502 = vcmp.lt.s32.totalorder %v483, 1
  %vm503 = vcmp.lt.s32.totalorder %v483, 2
  %vm504 = vcmp.lt.s32.totalorder %v483, 3
  %vm505 = vcmp.lt.s32.totalorder %v483, 4
  %v506 = vsel %vm502, %v486, %v489
  %v507 = vsel %vm505, %v495, 2102212464
  %v508 = vsel %vm504, %v492, %v507
  %v509 = vsel %vm503, %v506, %v508
  %v510 = vsel %vm502, %v489, %v492
  %v511 = vsel %vm505, %v498, 920167782
  %v512 = vsel %vm504, %v495, %v511
  %v513 = vsel %vm503, %v510, %v512
  %v514 = vsel %vm502, %v492, %v495
  %v515 = vsel %vm505, %v501, 1326507024
  %v516 = vsel %vm504, %v498, %v515
  %v517 = vsel %vm503, %v514, %v516
  %v518 = vshll.u32 %v478, 8
  %v519 = vmul.u32.u64.compose %v518, %v517
  %v520 = vextract.low.u32 %v519
  %v521 = vextract.high.u32 %v519
  %v522 = vmul.u32.u64.compose %v518, %v513
  %v523 = vextract.low.u32 %v522
  %v524 = vextract.high.u32 %v522
  %v525 = vmul.u32 %v518, %v509
  %v526 = vadd.s32 %v521, %v523
  %vm527 = vc.u32 %v521, %v523
  %v528 = vadd.s32 %v524, 1
  %v529 = vsel %vm527, %v528, %v524
  %v530 = vadd.s32 %v525, %v529
  %v531 = vadd.s32 %v530, 536870912
  %v532 = vshrl.u32 %v531, 30
  %v533 = vshll.u32 %v532, 30
  %v534 = vsub.s32 %v530, %v533
  %vm535 = vcmp.lt.s32.totalorder %v534, 0
  %v536 = vsub.s32 0, %v534
  %v537 = vsel %vm535, %v536, %v534
  %v538 = vclz %v537
  %v539 = vsub.s32 %v538, 2
  %vm540 = vcmp.gt.s32.totalorder 0, %v539
  %v541 = vsel %vm540, 0, %v539
  %v542 = vsub.s32 32, %v541
  %v543 = vshll.u32 %v534, %v541
  %v544 = vshrl.u32 %v526, %v542
  %v545 = vor.u32 %v543, %v544
  %v546 = vsub.s32 4294967266, %v541
  %v547 = vadd.s32 %v546, 127
  %v548 = vshll.u32 %v547, 23
  %v549 = vor.u32 4788187, %v548
  %v550 = vand.u32 2147483647, %v549
  %v552 = vcvt.s32.f32 %v545
  %v553 = vmul.f32 %v552, %v550
  %v554 = vxor.u32 %v553, 2147483648
  %v555 = vsel %vm472, %v554, %v553
  %v556 = vsub.s32 4, %v532
  %v557 = vsel %vm472, %v556, %v532
  %v558 = vsel %vm471, %v469, %v555
  %v559 = vsel %vm471, 0, %v557
  %v560 = vcosq.f32.pop %v558
  %v561 = vsinq.f32.pop %v558
  %vm562 = vweird.f32 %v469
  %v563 = vand.u32 %v559, 3
  %vm564 = vcmp.lt.s32.totalorder %v563, 2
  %vm565 = vcmp.eq.s32.totalorder %v563, 0
  %v566 = vxor.u32 %v561, 2147483648
  %v567 = vsel %vm565, %v560, %v566
  %vm568 = vcmp.eq.s32.totalorder %v563, 2
  %v569 = vxor.u32 %v560, 2147483648
  %v570 = vsel %vm568, %v569, %v561
  %v571 = vsel %vm564, %v567, %v570
  %v572 = vsel %vm562, nan, %v571
  %v573 = vadd.f32 %v572, 1.0
  %v574 = vmul.f32 %v573, 0.5
  %vm575 = vcmp.lt.f32.partialorder %v466, 5.0
  %v576 = vsel %vm575, %v574, 0.0
  %v577 = vsub.f32 0.0, %v466
  %v578 = vmul.f32 %v577, 1.442695
  %v579 = vpow.pop %v578
  %v580 = vld [vmem:[%s2] sm:$0x1]
  %v582 = vlaneseq
  %v583 = vshrl.u32 %v582, 7
  %v584 = vsub.s32 0, %v583
  %v585 = vrot.slane %v580, %v584
  %v587 = vsub.f32 %v579, %v585
  %v588 = vld [vmem:[%s3] sm:$0x1]
  %v589 = vmul.f32 %v587, %v587
  %v591 = vlaneseq
  %v592 = vshrl.u32 %v591, 7
  %v593 = vsub.s32 0, %v592
  %v594 = vrot.slane %v588, %v593
  %v596 = vmul.f32 %v594, %v589
  %v597 = vmul.f32 %v596, 1.442695
  %v598 = vpow.pop %v597
  %v599 = vmul.f32 %v576, %v598
  %600 = vst [vmem:[%s4] sm:$0xff] %v599
  // Predicated region
  $region18: #{rbf_emb_forward.1} parent=0 // pred_check
    _
  $region19: #{rbf_emb_forward.1} parent=0 // pred_check_branch
    %602 = sbr.rel (0) target = $region21
  $region20: #{rbf_emb_forward.1} parent=0 // pred_region
    _
  $region21: #{rbf_emb_forward.1} parent=0 // pred_fallthru
    _
  // Predicated region
  $region22: #{rbf_emb_forward.1} parent=0 // pred_check
    _
  $region23: #{rbf_emb_forward.1} parent=0 // pred_check_branch
    %604 = sbr.rel (0) target = $region25
  $region24: #{rbf_emb_forward.1} parent=0 // pred_region
    _
  $region25: #{rbf_emb_forward.1} parent=0 // pred_fallthru
    _

</llo_original>
